<compile_context>
chip_gen: v5e
topology: v5e:2x2
jax: 0.10.0
libtpu: 0.0.40
codegen_flags: <defaults>
</compile_context>

<pallas_src>
import functools

import jax
import jax.numpy as jnp
from jax.experimental import pallas as pl
from jax.experimental.pallas import tpu as pltpu

_LANES = 128
_SUBLANES = 8
_TARGET_BLOCK_BYTES = 4 * 1024 * 1024   # ~4 MiB of input per grid step
_MAX_ACC_ROWS = 128                     # accumulator sublane extent (16 vregs)


def _round_up(x: int, m: int) -> int:
    return ((x + m - 1) // m) * m


def _device_kind() -> str:
    try:
        return jax.devices()[0].device_kind.lower()
    except Exception:  # no devices visible at trace time -> conservative path
        return ""


def _is_v7x() -> bool:
    kind = _device_kind()
    return ("v7" in kind) or ("7x" in kind)


def _two_tensorcores() -> bool:
    """True only for devices where one JAX device spans 2 TensorCores."""
    kind = _device_kind()
    if _is_v7x():
        return True
    if ("lite" in kind) or ("v5e" in kind) or ("v6" in kind):
        return False                      # v5e / v6e: single TensorCore
    if "v4" in kind:
        return True                       # v4 megacore
    if "v5p" in kind or ("v5" in kind and "lite" not in kind):
        return True                       # v5p megacore
    return False                          # v2/v3/unknown: 1 core per device


def _make_in_spec(block_rows: int, in_map, triple_buffer: bool) -> pl.BlockSpec:
    if triple_buffer:
        try:
            return pl.BlockSpec((block_rows, _LANES), in_map,
                                pipeline_mode=pl.Buffered(3))
        except TypeError:                 # older API without pipeline_mode
            pass
    return pl.BlockSpec((block_rows, _LANES), in_map)


def _l1_partial_kernel(a_ref, b_ref, o_ref, *, block_rows, acc_rows,
                       blocks_per_split, valid_rows, needs_mask):
    c = pl.program_id(0)   # TensorCore shard ("parallel")
    i = pl.program_id(1)   # row-block within the shard ("arbitrary" reduction)

    # Zero this split's accumulator slab at the start of its reduction.
    @pl.when(i == 0)
    def _init():
        o_ref[...] = jnp.zeros_like(o_ref)

    diff = jnp.abs(a_ref[...].astype(jnp.float32) -
                   b_ref[...].astype(jnp.float32))
    chunks = block_rows // acc_rows

    def _accumulate(d):
        # Fold block rows into an (acc_rows, 128) slab: `chunks`-deep add
        # chains over acc_rows/8 independent vreg columns (pure VPU adds,
        # no cross-lane work).
        partial = d.reshape(chunks, acc_rows, _LANES).sum(axis=0)
        o_ref[...] += partial[None, ...]

    if not needs_mask:
        _accumulate(diff)
    else:
        # Logical (unclamped) global row range of this block.
        row_start = (c * blocks_per_split + i) * block_rows
        block_end = row_start + block_rows

        @pl.when(block_end <= valid_rows)
        def _fast_path():                 # fully in-range block: no mask work
            _accumulate(diff)

        @pl.when(block_end > valid_rows)
        def _masked_tail():               # partial / duplicated block
            row_ids = row_start + jax.lax.broadcasted_iota(
                jnp.int32, (block_rows, _LANES), 0)
            _accumulate(jnp.where(row_ids < valid_rows, diff, 0.0))


def l1_loss_pallas(image_a: jax.Array, image_b: jax.Array) -> jax.Array:
    assert image_a.shape == image_b.shape, "F.l1_loss semantics: equal shapes"
    n_elems = image_a.size
    if n_elems == 0:
        return jnp.float32(0.0)

    a_flat = image_a.reshape(-1)
    b_flat = image_b.reshape(-1)

    rows = n_elems // _LANES
    tail = n_elems - rows * _LANES

    if rows == 0:
        # Fewer than 128 elements: a kernel launch is pure overhead.
        diff = jnp.abs(a_flat.astype(jnp.float32) - b_flat.astype(jnp.float32))
        return (jnp.sum(diff) / jnp.float32(n_elems)).astype(jnp.float32)

    # Lane-dense main slab. When n_elems % 128 == 0 (common case) the reshape
    # is a free bitcast; otherwise only the <128-element tail is peeled off
    # and reduced in plain JAX (no full-array jnp.pad copy of both inputs).
    if tail:
        a_main = a_flat[: rows * _LANES]
        b_main = b_flat[: rows * _LANES]
    else:
        a_main, b_main = a_flat, b_flat
    a2d = a_main.reshape(rows, _LANES)
    b2d = b_main.reshape(rows, _LANES)

    # Dtype-aware block sizing: constant bytes per step, block sublane extent
    # on the packed tile boundary (8 f32 / 16 bf16 / 32 int8-fp8).
    itemsize = jnp.dtype(image_a.dtype).itemsize
    packing = _SUBLANES * max(1, 4 // max(1, itemsize))
    target_rows = max(packing, _TARGET_BLOCK_BYTES // (_LANES * itemsize))
    block_rows = min(_round_up(target_rows, packing), _round_up(rows, packing))

    # Accumulator sublane extent: largest divisor of block_rows that is a
    # multiple of 8 and <= 128 -> short, independent VPU add chains.
    acc_rows = _SUBLANES
    for cand in range(min(_MAX_ACC_ROWS, block_rows), _SUBLANES - 1, -_SUBLANES):
        if block_rows % cand == 0:
            acc_rows = cand
            break

    total_blocks = pl.cdiv(rows, block_rows)

    # Shard row blocks across TensorCores only on 2-TC devices.
    num_splits = 2 if (_two_tensorcores() and total_blocks >= 2) else 1
    blocks_per_split = pl.cdiv(total_blocks, num_splits)

    # Mask only when some block rows fall outside [0, rows): partial tail
    # block and/or a duplicated (clamped) block from an uneven core split.
    needs_mask = (num_splits * blocks_per_split * block_rows != rows)

    kernel = functools.partial(
        _l1_partial_kernel,
        block_rows=block_rows,
        acc_rows=acc_rows,
        blocks_per_split=blocks_per_split,
        valid_rows=rows,
        needs_mask=needs_mask,
    )

    def in_map(c, i):
        # Clamp so the DMA never targets a fully out-of-range block; any
        # duplicated data is zeroed by the in-kernel row mask (a select,
        # never a multiply, so garbage never propagates).
        return (jnp.minimum(c * blocks_per_split + i, total_blocks - 1), 0)

    triple_buffer = _is_v7x()
    in_spec = _make_in_spec(block_rows, in_map, triple_buffer)

    # Explicit VMEM budget: 2 inputs x (2 or 3) pipeline buffers + output
    # slab (double-buffered) + slack.  Kept well under v7x's 64 MiB physical.
    in_buffers = 3 if triple_buffer else 2
    block_bytes = block_rows * _LANES * itemsize
    vmem_need = 2 * in_buffers * block_bytes + 2 * acc_rows * _LANES * 4 + (4 << 20)
    vmem_limit = int(min(max(vmem_need, 16 << 20), 56 << 20))

    partials = pl.pallas_call(
        kernel,
        out_shape=jax.ShapeDtypeStruct((num_splits, acc_rows, _LANES),
                                       jnp.float32),
        grid_spec=pltpu.PrefetchScalarGridSpec(
            num_scalar_prefetch=0,
            grid=(num_splits, blocks_per_split),
            in_specs=[in_spec, in_spec],
            out_specs=pl.BlockSpec((1, acc_rows, _LANES),
                                   lambda c, i: (c, 0, 0)),
        ),
        compiler_params=pltpu.CompilerParams(
            dimension_semantics=("parallel", "arbitrary"),
            vmem_limit_bytes=vmem_limit,
        ),
    )(a2d, b2d)

    total = jnp.sum(partials)
    if tail:
        a_t = a_flat[rows * _LANES:].astype(jnp.float32)
        b_t = b_flat[rows * _LANES:].astype(jnp.float32)
        total = total + jnp.sum(jnp.abs(a_t - b_t))

    # Mean over the ORIGINAL element count (F.l1_loss default reduction).
    return (total / jnp.float32(n_elems)).astype(jnp.float32)


def _check(a, b, rtol=1e-5, atol=1e-6):
    loss = l1_loss_pallas(a, b)
    jax.block_until_ready(loss)
    ref = jnp.mean(jnp.abs(a.astype(jnp.float32) - b.astype(jnp.float32)))
    assert jnp.allclose(loss, ref, rtol=rtol, atol=atol), (loss, ref)
    return loss


if __name__ == "__main__":
    key = jax.random.PRNGKey(0)
    k1, k2, k3, k4, k5, k6 = jax.random.split(key, 6)

    # NCHW inputs, same as the PyTorch module would receive.
    image_A = jax.random.normal(k1, (2, 4, 16, 16), dtype=jnp.float32)
    image_B = jax.random.normal(k2, (2, 4, 16, 16), dtype=jnp.float32)
    _check(image_A, image_B)

    # Larger RGB-image-like shape: multi-vreg accumulator, lane-multiple size.
    big_A = jax.random.normal(k3, (2, 3, 224, 224), dtype=jnp.float32)
    big_B = jax.random.normal(k4, (2, 3, 224, 224), dtype=jnp.float32)
    _check(big_A, big_B)

    # Odd element count: exercises the masked tail block + lane-tail glue path.
    odd_A = jax.random.normal(k5, (1, 3, 37, 53), dtype=jnp.float32)
    odd_B = jax.random.normal(k6, (1, 3, 37, 53), dtype=jnp.float32)
    _check(odd_A, odd_B)

    # bf16 inputs stay bf16 in HBM; kernel upcasts in VMEM (packed-tile block).
    _check(image_A.astype(jnp.bfloat16), image_B.astype(jnp.bfloat16),
           rtol=1e-3, atol=1e-5)

    print("KERNEL_OK")
</pallas_src>

<mosaic_0001>
module attributes {stable_mosaic.version = 11 : i64} {
  func.func @_l1_partial_kernel(%arg0: i32, %arg1: i32, %arg2: memref<16x128xf32, #tpu.memory_space<vmem>>, %arg3: memref<16x128xf32, #tpu.memory_space<vmem>>, %arg4: memref<1x16x128xf32, #tpu.memory_space<vmem>>) attributes {dimension_semantics = [#tpu.dimension_semantics<parallel>, #tpu.dimension_semantics<arbitrary>], iteration_bounds = array<i64: 1, 1>, scalar_prefetch = 0 : i64, scratch_operands = 0 : i64, tpu.core_type = #tpu.core_type<tc>, window_params = [{transform_indices = @transform_0, window_bounds = array<i64: 16, 128>}, {transform_indices = @transform_1, window_bounds = array<i64: 16, 128>}, {transform_indices = @transform_2, window_bounds = array<i64: 1, 16, 128>}]} {
    %c0_i32 = arith.constant 0 : i32
    %0 = arith.cmpi eq, %arg1, %c0_i32 : i32
    %1 = arith.extui %0 : i1 to i32
    %c0_i32_0 = arith.constant 0 : i32
    %2 = arith.cmpi ne, %1, %c0_i32_0 : i32
    scf.if %2 {
      %cst_10 = arith.constant 0.000000e+00 : f32
      %13 = vector.broadcast %cst_10 : f32 to vector<1x16x128xf32>
      %c0_11 = arith.constant 0 : index
      %c0_12 = arith.constant 0 : index
      %c0_13 = arith.constant 0 : index
      %14 = vector.load %arg4[%c0_11, %c0_12, %c0_13] : memref<1x16x128xf32, #tpu.memory_space<vmem>>, vector<1x16x128xf32>
      tpu.vector_store %arg4[%c0_11, %c0_12, %c0_13], %13 {strides = array<i32>} : memref<1x16x128xf32, #tpu.memory_space<vmem>>, vector<1x16x128xf32>,
    } else {
    }
    %c0 = arith.constant 0 : index
    %c0_1 = arith.constant 0 : index
    %3 = vector.load %arg2[%c0, %c0_1] : memref<16x128xf32, #tpu.memory_space<vmem>>, vector<16x128xf32>
    %c0_2 = arith.constant 0 : index
    %c0_3 = arith.constant 0 : index
    %4 = vector.load %arg3[%c0_2, %c0_3] : memref<16x128xf32, #tpu.memory_space<vmem>>, vector<16x128xf32>
    %5 = arith.subf %3, %4 : vector<16x128xf32>
    %6 = math.absf %5 : vector<16x128xf32>
    %7 = vector.shape_cast %6 : vector<16x128xf32> to vector<1x16x128xf32>
    %cst = arith.constant dense<0.000000e+00> : vector<16x128xf32>
    %8 = vector.multi_reduction <add>, %7, %cst [0] : vector<1x16x128xf32> to vector<16x128xf32>
    %c0_4 = arith.constant 0 : index
    %c0_5 = arith.constant 0 : index
    %c0_6 = arith.constant 0 : index
    %9 = vector.load %arg4[%c0_4, %c0_5, %c0_6] : memref<1x16x128xf32, #tpu.memory_space<vmem>>, vector<1x16x128xf32>
    %10 = vector.shape_cast %8 : vector<16x128xf32> to vector<1x16x128xf32>
    %11 = arith.addf %9, %10 : vector<1x16x128xf32>
    %c0_7 = arith.constant 0 : index
    %c0_8 = arith.constant 0 : index
    %c0_9 = arith.constant 0 : index
    %12 = vector.load %arg4[%c0_7, %c0_8, %c0_9] : memref<1x16x128xf32, #tpu.memory_space<vmem>>, vector<1x16x128xf32>
    tpu.vector_store %arg4[%c0_7, %c0_8, %c0_9], %11 {strides = array<i32>} : memref<1x16x128xf32, #tpu.memory_space<vmem>>, vector<1x16x128xf32>,
    return
  }
  func.func @transform_0(%arg0: i32, %arg1: i32) -> (i32, i32) {
    %c1_i32 = arith.constant 1 : i32
    %0 = arith.muli %arg0, %c1_i32 : i32
    %1 = arith.addi %0, %arg1 : i32
    %c0_i32 = arith.constant 0 : i32
    %2 = arith.minsi %1, %c0_i32 : i32
    %c0_i32_0 = arith.constant 0 : i32
    %c0_i32_1 = arith.constant 0 : i32
    return %2, %c0_i32_0 : i32, i32
  }
  func.func @transform_1(%arg0: i32, %arg1: i32) -> (i32, i32) {
    %c1_i32 = arith.constant 1 : i32
    %0 = arith.muli %arg0, %c1_i32 : i32
    %1 = arith.addi %0, %arg1 : i32
    %c0_i32 = arith.constant 0 : i32
    %2 = arith.minsi %1, %c0_i32 : i32
    %c0_i32_0 = arith.constant 0 : i32
    %c0_i32_1 = arith.constant 0 : i32
    return %2, %c0_i32_0 : i32, i32
  }
  func.func @transform_2(%arg0: i32, %arg1: i32) -> (i32, i32, i32) {
    %c0_i32 = arith.constant 0 : i32
    %c0_i32_0 = arith.constant 0 : i32
    %c0_i32_1 = arith.constant 0 : i32
    return %arg0, %c0_i32, %c0_i32_0 : i32, i32, i32
  }
}

</mosaic_0001>

<llo_original>
// kernel: tpu_custom_call.1
$region0: #{tpu_custom_call.1}
  #allocation0 [shape = 'u32[]', space=smem, size = 0x4, offset = 0x4, fixed_abs, tag = 'smem constant byte address 0x4 - core index']
  #allocation1 [shape = 'u32[72,128]{1,0:T(1,128)}', space=vmem, size = 0x9000, scoped, tag = 'internal scratch']
  %s0 = inlined_call_operand.hbm [shape: f32[16,128], index: 0, kind: input, shape index: {}]
  %s1 = inlined_call_operand.hbm [shape: f32[16,128], index: 1, kind: input, shape index: {}]
  %s2 = inlined_call_operand.hbm [shape: f32[1,16,128], index: 2, kind: output, shape index: {}]
  %s3 = sld [smem:[#allocation0]]
  $region30: #{tpu_custom_call.1} parent=0
    _
  %s5 = ssub.s32 1, %s3
  %s6 = scalar_select 0, %s5, %s3
  $region1: #{tpu_custom_call.1} parent=0
    #allocation2 [shape = 'u8[8192]{0}', space=vmem, size = 0x2000, scoped, tag = 'input window, operand 0, single buffered']
    #allocation3 [shape = 's32[1]{0}', space=sflag, size = 0x4, scoped, tag = 'scoped memory for tpu_custom_call.1']
    #allocation4 [shape = 's32[1]{0}', space=sflag, size = 0x4, scoped, tag = 'scoped memory for tpu_custom_call.1']
    #allocation5 [shape = 'u8[8192]{0}', space=vmem, size = 0x2000, scoped, tag = 'input window, operand 1, single buffered']
    #allocation6 [shape = 's32[1]{0}', space=sflag, size = 0x4, scoped, tag = 'scoped memory for tpu_custom_call.1']
    #allocation7 [shape = 'u8[8192]{0}', space=vmem, size = 0x2000, scoped, tag = 'output window, operand 0, single buffered']
    %7 = vsyncpa [#allocation3], 0
    %8 = vsyncpa [#allocation6], 0
    %9 = vsyncpa [#allocation4], 0
    // Predicated region
    $region2: #{tpu_custom_call.1} parent=1 // pred_check
      _
    $region3: #{tpu_custom_call.1} parent=1 // pred_check_branch
      %11 = sbr.rel (0) target = $region5
    $region4: #{tpu_custom_call.1} parent=1 // pred_region
      %s12 = sadd.s32 0, 0
      %p13 = scmp.lt.s32.totalorder %s12, 0
      %s14 = scalar_select %p13, %s12, 0
      %s15 = smul.u32 2, %s14
      %17 = vsyncadd [#allocation3], 0
      %s18 = smul.addr %s15, 8
      %s19 = scalar_lea.hbm %s0, %s18
      %s20 = sshll.u32 %s19, 4
      %s21 = int_to_ptr.hbm [resolvable:$true] %s20
      %s22 = sshll.u32 [#allocation2], 4
      %s23 = int_to_ptr.vmem [resolvable:$true] %s22
      %28 = dma.hbm_to_vmem [thread:$0]  %s21, 256, %s23, [#allocation3], 128, 128, 8
    $region5: #{tpu_custom_call.1} parent=1 // pred_fallthru
      _
    // Predicated region
    $region6: #{tpu_custom_call.1} parent=1 // pred_check
      _
    $region7: #{tpu_custom_call.1} parent=1 // pred_check_branch
      %30 = sbr.rel (0) target = $region9
    $region8: #{tpu_custom_call.1} parent=1 // pred_region
      %s31 = sadd.s32 0, 0
      %p32 = scmp.lt.s32.totalorder %s31, 0
      %s33 = scalar_select %p32, %s31, 0
      %s34 = smul.u32 2, %s33
      %36 = vsyncadd [#allocation6], 0
      %s37 = smul.addr %s34, 8
      %s38 = scalar_lea.hbm %s1, %s37
      %s39 = sshll.u32 %s38, 4
      %s40 = int_to_ptr.hbm [resolvable:$true] %s39
      %s41 = sshll.u32 [#allocation5], 4
      %s42 = int_to_ptr.vmem [resolvable:$true] %s41
      %47 = dma.hbm_to_vmem [thread:$0]  %s40, 256, %s42, [#allocation6], 128, 128, 8
    $region9: #{tpu_custom_call.1} parent=1 // pred_fallthru
      _
    // Predicated region
    $region10: #{tpu_custom_call.1} parent=1 // pred_check
      _
    $region11: #{tpu_custom_call.1} parent=1 // pred_check_branch
      %49 = sbr.rel (0) target = $region13
    $region12: #{tpu_custom_call.1} parent=1 // pred_region
      %51 = dma.done [#allocation3], 256
    $region13: #{tpu_custom_call.1} parent=1 // pred_fallthru
      _
    // Predicated region
    $region14: #{tpu_custom_call.1} parent=1 // pred_check
      _
    $region15: #{tpu_custom_call.1} parent=1 // pred_check_branch
      %53 = sbr.rel (0) target = $region17
    $region16: #{tpu_custom_call.1} parent=1 // pred_region
      %55 = dma.done [#allocation6], 256
    $region17: #{tpu_custom_call.1} parent=1 // pred_fallthru
      _
    %s56 = sadd.s32 0, 0
    %p57 = scmp.lt.s32.totalorder %s56, 0
    %s58 = scalar_select %p57, %s56, 0
    %s59 = smul.u32 2, %s58
    %s60 = sadd.s32 0, 0
    %p61 = scmp.lt.s32.totalorder %s60, 0
    %s62 = scalar_select %p61, %s60, 0
    %s63 = smul.u32 2, %s62
    %p64 = scmp.eq.s32.totalorder 0, 0
    // Predicated region
    $region18: #{tpu_custom_call.1} parent=1 // pred_check
      %p65 = pneg %p64
    $region19: #{tpu_custom_call.1} parent=1 // pred_check_branch
      %67 = sbr.rel (%p65) target = $region21
    $region20: #{tpu_custom_call.1} parent=1 // pred_region
      %68 = vst [vmem:[#allocation7] sm:$0xff] 0.0
      %69 = vst [vmem:[#allocation7 + $0x8] sm:$0xff] 0.0
    $region21: #{tpu_custom_call.1} parent=1 // pred_fallthru
      _
    %v70 = vld [vmem:[#allocation2] sm:$0xff]
    %v71 = vld [vmem:[#allocation2 + $0x8] sm:$0xff]
    %v72 = vld [vmem:[#allocation5] sm:$0xff]
    %v73 = vld [vmem:[#allocation5 + $0x8] sm:$0xff]
    %v74 = vsub.f32 %v70, %v72
    %v75 = vsub.f32 %v71, %v73
    %v76 = vand.u32 2147483647, %v74
    %v77 = vand.u32 2147483647, %v75
    %v78 = vadd.f32 %v76, 0.0
    %v79 = vadd.f32 %v77, 0.0
    %v80 = vld [vmem:[#allocation7] sm:$0xff]
    %v81 = vld [vmem:[#allocation7 + $0x8] sm:$0xff]
    %v82 = vadd.f32 %v80, %v78
    %v83 = vadd.f32 %v81, %v79
    %84 = vst [vmem:[#allocation7] sm:$0xff] %v82
    %85 = vst [vmem:[#allocation7 + $0x8] sm:$0xff] %v83
    // Predicated region
    $region22: #{tpu_custom_call.1} parent=1 // pred_check
      _
    $region23: #{tpu_custom_call.1} parent=1 // pred_check_branch
      %87 = sbr.rel (0) target = $region25
    $region24: #{tpu_custom_call.1} parent=1 // pred_region
      %89 = vsyncadd [#allocation4], 0
      %s90 = sshll.u32 [#allocation7], 4
      %s91 = int_to_ptr.vmem [resolvable:$true] %s90
      %s92 = sshll.u32 %s2, 4
      %s93 = int_to_ptr.hbm [resolvable:$true] %s92
      %98 = dma.vmem_to_hbm [thread:$0]  %s91, 256, %s93, [#allocation4], 128, 128, 8
    $region25: #{tpu_custom_call.1} parent=1 // pred_fallthru
      _
    // Predicated region
    $region26: #{tpu_custom_call.1} parent=1 // pred_check
      _
    $region27: #{tpu_custom_call.1} parent=1 // pred_check_branch
      %100 = sbr.rel (0) target = $region29
    $region28: #{tpu_custom_call.1} parent=1 // pred_region
      %102 = dma.done [#allocation4], 256
    $region29: #{tpu_custom_call.1} parent=1 // pred_fallthru
      _
    %103 = vsyncpa [#allocation3], 1
    %104 = vsyncpa [#allocation6], 1
    %105 = vsyncpa [#allocation4], 1

</llo_original>
